<compile_context>
chip_gen: v7x
topology: tpu7x:2x2x1
jax: 0.10.0
libtpu: 0.0.40
codegen_flags: <defaults>
</compile_context>

<pallas_src>
import jax
import jax.numpy as jnp
from jax.experimental import pallas as pl
from jax.experimental.pallas import tpu as pltpu


def _choose_tile(L, tile_l):
    """Pick a length tile TL (and tile count nT) so the output slab is lane-dense
    and, when possible, Lr == L so no trailing slice copy is needed."""
    if L <= tile_l:
        return L, 1                       # single tile == full extent (always legal)
    best = None
    for cand in range(128, tile_l + 1, 128):
        if L % cand == 0:
            best = cand                   # largest 128-multiple divisor of L
    if best is not None:
        return best, L // best
    return tile_l, -(-L // tile_l)        # fall back: pad L up to nT*tile_l


def _make_resblock_kernel(TL, K, d1, d2, pad2, halo, use_resproj, compute_dtype):
    Le = TL + 2 * pad2          # extended conv1 output length per tile
    Lw = TL + 2 * halo          # x window length per tile

    def kernel(xp_ref, mask_ref, w1_ref, b1_ref, a1_ref, w2_ref, b2_ref, a2_ref,
               *rest):
        if use_resproj:
            wr_ref, br_ref, out_ref = rest
        else:
            (out_ref,) = rest

        t = pl.program_id(1)
        start = pl.multiple_of(t * TL, TL)          # lane-aligned window start

        # Single lane-dense load of the x window for this tile: (Cin, TL+2*halo),
        # channels on sublanes, length on lanes.
        xt = xp_ref[:, pl.ds(start, Lw)]

        # ---- conv1 (dilated, SAME): stack the K taps on sublanes, ONE dot ----
        x_taps = jnp.concatenate([xt[:, k * d1:k * d1 + Le] for k in range(K)],
                                 axis=0)                       # (K*Cin, Le)
        h = jnp.dot(w1_ref[...], x_taps.astype(compute_dtype),
                    preferred_element_type=jnp.float32)        # (H, Le) f32
        h = h + b1_ref[...]
        h = jnp.where(h >= 0, h, a1_ref[...] * h)              # PReLU
        # Reproduce conv2's SAME zero-padding of h: zero columns outside [0, L)
        # (bias/PReLU make them nonzero).  One multiply by a precomputed mask row.
        h = h * mask_ref[:, pl.ds(start, Le)]

        # ---- conv2 (dilated, SAME): stacked taps, ONE dot, + bias + PReLU ----
        h_taps = jnp.concatenate([h[:, k * d2:k * d2 + TL] for k in range(K)],
                                 axis=0)                       # (K*H, TL)
        y = jnp.dot(w2_ref[...], h_taps.astype(compute_dtype),
                    preferred_element_type=jnp.float32)        # (Cout, TL) f32
        y = y + b2_ref[...]
        y = jnp.where(y >= 0, y, a2_ref[...] * y)              # PReLU

        # ---- residual (reuse the already-loaded x window) ----
        if use_resproj:
            ident = jnp.dot(wr_ref[...],
                            xt[:, halo:halo + TL].astype(compute_dtype),
                            preferred_element_type=jnp.float32) + br_ref[...]
        else:
            ident = xt[:, halo:halo + TL]                      # exact identity (f32)

        out_ref[...] = (y + ident).astype(out_ref.dtype)       # lane-dense store

    return kernel


def resblock_pallas(x_ncl, params, *, kernel_size, dilations, tile_l=1024,
                    compute_dtype=jnp.float32):
    """x_ncl: (B, Cin, L) float32.  Returns (B, Cout, L) float32."""
    w1, b1, a1, w2, b2, a2, wr, br = params
    B, Cin, L = x_ncl.shape
    K = kernel_size
    assert K % 2 == 1, "even kernel_size changes output length in PyTorch; not supported"
    assert tile_l % 128 == 0
    d1, d2 = dilations
    pad1 = (K // 2) * d1
    pad2 = (K // 2) * d2
    halo = pad1 + pad2
    H = w1.shape[0]        # torch layout: (H, Cin, K)
    Cout = w2.shape[0]     # torch layout: (Cout, H, K)
    use_resproj = wr is not None

    TL, nT = _choose_tile(L, tile_l)
    Lr = nT * TL
    Lp = Lr + 2 * halo          # padded x row length
    Lm = Lr + 2 * pad2          # mask row length (conv1 extended-output coords)

    # Zero-pad the length axis once: `halo` left (fused SAME padding of both
    # convs) and `halo + (Lr - L)` right (SAME padding + round L up to nT*TL).
    xp = jnp.pad(x_ncl, ((0, 0), (0, 0), (halo, halo + Lr - L)))

    # h-validity mask in conv1-extended coordinates: column m maps to global
    # position q = m - pad2; valid iff 0 <= q < L.
    q = jnp.arange(Lm) - pad2
    mask = ((q >= 0) & (q < L)).astype(jnp.float32).reshape(1, Lm)

    # Tap-stacked weights matching the in-kernel sublane stacking order:
    #   w1s[h, k*Cin + c] = w1[h, c, k]    /    w2s[o, k*H + h] = w2[o, h, k]
    w1s = jnp.transpose(w1, (0, 2, 1)).reshape(H, K * Cin).astype(compute_dtype)
    w2s = jnp.transpose(w2, (0, 2, 1)).reshape(Cout, K * H).astype(compute_dtype)
    b1k, a1k = b1.reshape(H, 1), a1.reshape(H, 1)
    b2k, a2k = b2.reshape(Cout, 1), a2.reshape(Cout, 1)

    inputs = [xp, mask, w1s, b1k, a1k, w2s, b2k, a2k]
    in_specs = [
        # full padded row per batch; block index depends only on b -> DMAed once
        # per batch even though the L-tile axis iterates.
        pl.BlockSpec((None, Cin, Lp), lambda b, t: (b, 0, 0)),
        pl.BlockSpec((1, Lm), lambda b, t: (0, 0)),
        pl.BlockSpec((H, K * Cin), lambda b, t: (0, 0)),
        pl.BlockSpec((H, 1), lambda b, t: (0, 0)),
        pl.BlockSpec((H, 1), lambda b, t: (0, 0)),
        pl.BlockSpec((Cout, K * H), lambda b, t: (0, 0)),
        pl.BlockSpec((Cout, 1), lambda b, t: (0, 0)),
        pl.BlockSpec((Cout, 1), lambda b, t: (0, 0)),
    ]
    if use_resproj:
        wrk = wr[:, :, 0].astype(compute_dtype)     # (Cout, Cin)
        brk = br.reshape(Cout, 1)
        inputs += [wrk, brk]
        in_specs += [
            pl.BlockSpec((Cout, Cin), lambda b, t: (0, 0)),
            pl.BlockSpec((Cout, 1), lambda b, t: (0, 0)),
        ]

    kernel = _make_resblock_kernel(TL, K, d1, d2, pad2, halo, use_resproj,
                                   compute_dtype)

    # VMEM budget: every input spec is double-buffered by the pipeline; the x
    # row dominates.  Derive the limit instead of hard-coding 32 MiB so larger
    # L / TL still fit on v5e/v6e (cap 96 MiB; see v7x TODO at the top).
    w_item = jnp.dtype(compute_dtype).itemsize
    est = 2 * (Cin * Lp * 4 + Lm * 4
               + (H * K * Cin + Cout * K * H
                  + (Cout * Cin if use_resproj else 0)) * w_item
               + (2 * H + 2 * Cout + (Cout if use_resproj else 0)) * 4
               + Cout * TL * 4)
    vmem_limit = int(min(max(32 * 1024 * 1024, 2 * est), 96 * 1024 * 1024))

    out = pl.pallas_call(
        kernel,
        out_shape=jax.ShapeDtypeStruct((B, Cout, Lr), jnp.float32),
        grid=(B, nT),
        in_specs=in_specs,
        out_specs=pl.BlockSpec((None, Cout, TL), lambda b, t: (b, 0, t)),
        compiler_params=pltpu.CompilerParams(
            dimension_semantics=("parallel", "parallel"),
            vmem_limit_bytes=vmem_limit),
    )(*inputs)

    if Lr != L:
        out = out[:, :, :L]
    return out                                   # already (B, Cout, L) — no transpose


# ----------------------------- reference (plain JAX) -----------------------------
def _conv1d_ref(x, w, b, dilation, pad):
    # x: (B, Cin, L), w: (Cout, Cin, K) (torch layout)
    y = jax.lax.conv_general_dilated(
        x, w, window_strides=(1,), padding=[(pad, pad)],
        rhs_dilation=(dilation,), dimension_numbers=("NCH", "OIH", "NCH"))
    return y + b[None, :, None]


def resblock_ref(x, params, *, kernel_size, dilations):
    w1, b1, a1, w2, b2, a2, wr, br = params
    K = kernel_size
    d1, d2 = dilations
    h = _conv1d_ref(x, w1, b1, d1, (K // 2) * d1)
    h = jnp.where(h >= 0, h, a1[None, :, None] * h)
    y = _conv1d_ref(h, w2, b2, d2, (K // 2) * d2)
    y = jnp.where(y >= 0, y, a2[None, :, None] * y)
    ident = x
    if wr is not None:
        ident = _conv1d_ref(x, wr, br, 1, 0)
    return y + ident


if __name__ == "__main__":
    key = jax.random.PRNGKey(0)

    def make_params(k, Cin, H, Cout, K, with_resproj):
        ks = jax.random.split(k, 6)
        w1 = jax.random.normal(ks[0], (H, Cin, K), jnp.float32) * 0.1
        b1 = jax.random.normal(ks[1], (H,), jnp.float32) * 0.1
        a1 = jnp.full((H,), 0.25, jnp.float32)                 # PReLU alpha
        w2 = jax.random.normal(ks[2], (Cout, H, K), jnp.float32) * 0.1
        b2 = jax.random.normal(ks[3], (Cout,), jnp.float32) * 0.1
        a2 = jnp.full((Cout,), 0.25, jnp.float32)
        if with_resproj:
            wr = jax.random.normal(ks[4], (Cout, Cin, 1), jnp.float32) * 0.1
            br = jax.random.normal(ks[5], (Cout,), jnp.float32) * 0.1
        else:
            wr, br = None, None
        return (w1, b1, a1, w2, b2, a2, wr, br)

    K = 3
    dilations = (1, 2)
    k0, k1, k2, k3, k4 = jax.random.split(key, 5)

    # Case 1: ResBlock(in=4, out=8, hidden=6) -> resproj present; single L tile.
    B, Cin, L, H, Cout = 2, 4, 256, 6, 8
    x = jax.random.normal(k0, (B, Cin, L), jnp.float32)
    params = make_params(k1, Cin, H, Cout, K, True)
    out = jax.block_until_ready(
        resblock_pallas(x, params, kernel_size=K, dilations=dilations))
    ref = resblock_ref(x, params, kernel_size=K, dilations=dilations)
    assert out.shape == (B, Cout, L)
    assert jnp.allclose(out, ref, atol=1e-4, rtol=1e-4), "mismatch (resproj, f32)"

    # Case 2: ResBlock(in=8, out=8, hidden=8) -> identity shortcut (no resproj).
    Cin2 = H2 = Cout2 = 8
    x2 = jax.random.normal(k2, (B, Cin2, L), jnp.float32)
    params2 = make_params(k3, Cin2, H2, Cout2, K, False)
    out2 = jax.block_until_ready(
        resblock_pallas(x2, params2, kernel_size=K, dilations=dilations))
    ref2 = resblock_ref(x2, params2, kernel_size=K, dilations=dilations)
    assert out2.shape == (B, Cout2, L)
    assert jnp.allclose(out2, ref2, atol=1e-4, rtol=1e-4), "mismatch (identity, f32)"

    # Case 3: multi-tile path (L not a multiple of the tile) + boundary masks
    #         + trailing slice; resproj config, explicit small tile.
    L3 = 333
    x3 = jax.random.normal(k4, (B, Cin, L3), jnp.float32)
    out3 = jax.block_until_ready(
        resblock_pallas(x3, params, kernel_size=K, dilations=dilations, tile_l=128))
    ref3 = resblock_ref(x3, params, kernel_size=K, dilations=dilations)
    assert out3.shape == (B, Cout, L3)
    assert jnp.allclose(out3, ref3, atol=1e-4, rtol=1e-4), "mismatch (multi-tile, f32)"

    # Case 4: bf16 dot operands (f32 accumulation) — looser tolerance.
    out4 = jax.block_until_ready(
        resblock_pallas(x, params, kernel_size=K, dilations=dilations,
                        compute_dtype=jnp.bfloat16))
    assert out4.shape == (B, Cout, L)
    assert jnp.allclose(out4, ref, atol=3e-2, rtol=3e-2), "mismatch (resproj, bf16)"

    print("KERNEL_OK")
</pallas_src>

<mosaic_0001>
module attributes {stable_mosaic.version = 11 : i64} {
  func.func @kernel(%arg0: i32, %arg1: i32, %arg2: memref<1x4x262xf32, #tpu.memory_space<vmem>>, %arg3: memref<1x260xf32, #tpu.memory_space<vmem>>, %arg4: memref<6x12xf32, #tpu.memory_space<vmem>>, %arg5: memref<6x1xf32, #tpu.memory_space<vmem>>, %arg6: memref<6x1xf32, #tpu.memory_space<vmem>>, %arg7: memref<8x18xf32, #tpu.memory_space<vmem>>, %arg8: memref<8x1xf32, #tpu.memory_space<vmem>>, %arg9: memref<8x1xf32, #tpu.memory_space<vmem>>, %arg10: memref<8x4xf32, #tpu.memory_space<vmem>>, %arg11: memref<8x1xf32, #tpu.memory_space<vmem>>, %arg12: memref<1x8x256xf32, #tpu.memory_space<vmem>>) attributes {dimension_semantics = [#tpu.dimension_semantics<parallel>, #tpu.dimension_semantics<parallel>], iteration_bounds = array<i64: 2, 1>, scalar_prefetch = 0 : i64, scratch_operands = 0 : i64, tpu.core_type = #tpu.core_type<tc>, window_params = [{transform_indices = @transform_0, window_bounds = array<i64: 1, 4, 262>}, {pipeline_mode = #tpu.pipeline_mode<synchronous>, transform_indices = @transform_1, window_bounds = array<i64: 1, 260>}, {pipeline_mode = #tpu.pipeline_mode<synchronous>, transform_indices = @transform_2, window_bounds = array<i64: 6, 12>}, {pipeline_mode = #tpu.pipeline_mode<synchronous>, transform_indices = @transform_3, window_bounds = array<i64: 6, 1>}, {pipeline_mode = #tpu.pipeline_mode<synchronous>, transform_indices = @transform_4, window_bounds = array<i64: 6, 1>}, {pipeline_mode = #tpu.pipeline_mode<synchronous>, transform_indices = @transform_5, window_bounds = array<i64: 8, 18>}, {pipeline_mode = #tpu.pipeline_mode<synchronous>, transform_indices = @transform_6, window_bounds = array<i64: 8, 1>}, {pipeline_mode = #tpu.pipeline_mode<synchronous>, transform_indices = @transform_7, window_bounds = array<i64: 8, 1>}, {pipeline_mode = #tpu.pipeline_mode<synchronous>, transform_indices = @transform_8, window_bounds = array<i64: 8, 4>}, {pipeline_mode = #tpu.pipeline_mode<synchronous>, transform_indices = @transform_9, window_bounds = array<i64: 8, 1>}, {transform_indices = @transform_10, window_bounds = array<i64: 1, 8, 256>}]} {
    %c256_i32 = arith.constant 256 : i32
    %0 = arith.muli %arg1, %c256_i32 : i32
    %1 = tpu.assume_multiple %0, 256 : i32
    %c0 = arith.constant 0 : index
    %c0_0 = arith.constant 0 : index
    %2 = arith.index_cast %1 : i32 to index
    %3 = vector.load %arg2[%c0, %c0_0, %2] : memref<1x4x262xf32, #tpu.memory_space<vmem>>, vector<1x4x262xf32>
    %4 = vector.shape_cast %3 : vector<1x4x262xf32> to vector<4x262xf32>
    %5 = vector.extract_strided_slice %4 {offsets = [0, 0], sizes = [4, 260], strides = [1, 1]} : vector<4x262xf32> to vector<4x260xf32>
    %6 = vector.extract_strided_slice %4 {offsets = [0, 1], sizes = [4, 260], strides = [1, 1]} : vector<4x262xf32> to vector<4x260xf32>
    %7 = vector.extract_strided_slice %4 {offsets = [0, 2], sizes = [4, 260], strides = [1, 1]} : vector<4x262xf32> to vector<4x260xf32>
    %8 = tpu.concatenate %5, %6, %7 in 0 : vector<4x260xf32>, vector<4x260xf32>, vector<4x260xf32> -> vector<12x260xf32>
    %c0_1 = arith.constant 0 : index
    %c0_2 = arith.constant 0 : index
    %9 = vector.load %arg4[%c0_1, %c0_2] : memref<6x12xf32, #tpu.memory_space<vmem>>, vector<6x12xf32>
    %cst = arith.constant dense<0.000000e+00> : vector<6x260xf32>
    %10 = tpu.matmul %9, %8, %cst {dimension_numbers = #tpu.dot_dimension_numbers<[1], [0], [0], [1], [0, 0, 1, 1], [], []>} : vector<6x12xf32>, vector<12x260xf32>, vector<6x260xf32> -> vector<6x260xf32>
    %c0_3 = arith.constant 0 : index
    %c0_4 = arith.constant 0 : index
    %11 = vector.load %arg5[%c0_3, %c0_4] : memref<6x1xf32, #tpu.memory_space<vmem>>, vector<6x1xf32>
    %12 = vector.broadcast %11 : vector<6x1xf32> to vector<6x260xf32>
    %13 = arith.addf %10, %12 : vector<6x260xf32>
    %cst_5 = arith.constant 0.000000e+00 : f32
    %14 = vector.broadcast %cst_5 : f32 to vector<6x260xf32>
    %15 = arith.cmpf oge, %13, %14 : vector<6x260xf32>
    %c0_6 = arith.constant 0 : index
    %c0_7 = arith.constant 0 : index
    %16 = vector.load %arg6[%c0_6, %c0_7] : memref<6x1xf32, #tpu.memory_space<vmem>>, vector<6x1xf32>
    %17 = vector.broadcast %16 : vector<6x1xf32> to vector<6x260xf32>
    %18 = arith.mulf %17, %13 : vector<6x260xf32>
    %19 = arith.select %15, %13, %18 : vector<6x260xi1>, vector<6x260xf32>
    %c0_8 = arith.constant 0 : index
    %20 = arith.index_cast %1 : i32 to index
    %21 = vector.load %arg3[%c0_8, %20] : memref<1x260xf32, #tpu.memory_space<vmem>>, vector<1x260xf32>
    %22 = vector.broadcast %21 : vector<1x260xf32> to vector<6x260xf32>
    %23 = arith.mulf %19, %22 : vector<6x260xf32>
    %24 = vector.extract_strided_slice %23 {offsets = [0, 0], sizes = [6, 256], strides = [1, 1]} : vector<6x260xf32> to vector<6x256xf32>
    %25 = vector.extract_strided_slice %23 {offsets = [0, 2], sizes = [6, 256], strides = [1, 1]} : vector<6x260xf32> to vector<6x256xf32>
    %26 = vector.extract_strided_slice %23 {offsets = [0, 4], sizes = [6, 256], strides = [1, 1]} : vector<6x260xf32> to vector<6x256xf32>
    %27 = tpu.concatenate %24, %25, %26 in 0 : vector<6x256xf32>, vector<6x256xf32>, vector<6x256xf32> -> vector<18x256xf32>
    %c0_9 = arith.constant 0 : index
    %c0_10 = arith.constant 0 : index
    %28 = vector.load %arg7[%c0_9, %c0_10] : memref<8x18xf32, #tpu.memory_space<vmem>>, vector<8x18xf32>
    %cst_11 = arith.constant dense<0.000000e+00> : vector<8x256xf32>
    %29 = tpu.matmul %28, %27, %cst_11 {dimension_numbers = #tpu.dot_dimension_numbers<[1], [0], [0], [1], [0, 0, 1, 1], [], []>} : vector<8x18xf32>, vector<18x256xf32>, vector<8x256xf32> -> vector<8x256xf32>
    %c0_12 = arith.constant 0 : index
    %c0_13 = arith.constant 0 : index
    %30 = vector.load %arg8[%c0_12, %c0_13] : memref<8x1xf32, #tpu.memory_space<vmem>>, vector<8x1xf32>
    %31 = vector.broadcast %30 : vector<8x1xf32> to vector<8x256xf32>
    %32 = arith.addf %29, %31 : vector<8x256xf32>
    %cst_14 = arith.constant 0.000000e+00 : f32
    %33 = vector.broadcast %cst_14 : f32 to vector<8x256xf32>
    %34 = arith.cmpf oge, %32, %33 : vector<8x256xf32>
    %c0_15 = arith.constant 0 : index
    %c0_16 = arith.constant 0 : index
    %35 = vector.load %arg9[%c0_15, %c0_16] : memref<8x1xf32, #tpu.memory_space<vmem>>, vector<8x1xf32>
    %36 = vector.broadcast %35 : vector<8x1xf32> to vector<8x256xf32>
    %37 = arith.mulf %36, %32 : vector<8x256xf32>
    %38 = arith.select %34, %32, %37 : vector<8x256xi1>, vector<8x256xf32>
    %c0_17 = arith.constant 0 : index
    %c0_18 = arith.constant 0 : index
    %39 = vector.load %arg10[%c0_17, %c0_18] : memref<8x4xf32, #tpu.memory_space<vmem>>, vector<8x4xf32>
    %40 = vector.extract_strided_slice %4 {offsets = [0, 3], sizes = [4, 256], strides = [1, 1]} : vector<4x262xf32> to vector<4x256xf32>
    %cst_19 = arith.constant dense<0.000000e+00> : vector<8x256xf32>
    %41 = tpu.matmul %39, %40, %cst_19 {dimension_numbers = #tpu.dot_dimension_numbers<[1], [0], [0], [1], [0, 0, 1, 1], [], []>} : vector<8x4xf32>, vector<4x256xf32>, vector<8x256xf32> -> vector<8x256xf32>
    %c0_20 = arith.constant 0 : index
    %c0_21 = arith.constant 0 : index
    %42 = vector.load %arg11[%c0_20, %c0_21] : memref<8x1xf32, #tpu.memory_space<vmem>>, vector<8x1xf32>
    %43 = vector.broadcast %42 : vector<8x1xf32> to vector<8x256xf32>
    %44 = arith.addf %41, %43 : vector<8x256xf32>
    %45 = arith.addf %38, %44 : vector<8x256xf32>
    %c0_22 = arith.constant 0 : index
    %c0_23 = arith.constant 0 : index
    %c0_24 = arith.constant 0 : index
    %46 = vector.load %arg12[%c0_22, %c0_23, %c0_24] : memref<1x8x256xf32, #tpu.memory_space<vmem>>, vector<1x8x256xf32>
    %47 = vector.shape_cast %46 : vector<1x8x256xf32> to vector<8x256xf32>
    %48 = vector.shape_cast %45 : vector<8x256xf32> to vector<1x8x256xf32>
    tpu.vector_store %arg12[%c0_22, %c0_23, %c0_24], %48 {strides = array<i32>} : memref<1x8x256xf32, #tpu.memory_space<vmem>>, vector<1x8x256xf32>,
    return
  }
  func.func @transform_0(%arg0: i32, %arg1: i32) -> (i32, i32, i32) {
    %c0_i32 = arith.constant 0 : i32
    %c0_i32_0 = arith.constant 0 : i32
    %c0_i32_1 = arith.constant 0 : i32
    return %arg0, %c0_i32, %c0_i32_0 : i32, i32, i32
  }
  func.func @transform_1(%arg0: i32, %arg1: i32) -> (i32, i32) {
    %c0_i32 = arith.constant 0 : i32
    %c0_i32_0 = arith.constant 0 : i32
    %c0_i32_1 = arith.constant 0 : i32
    return %c0_i32, %c0_i32_0 : i32, i32
  }
  func.func @transform_2(%arg0: i32, %arg1: i32) -> (i32, i32) {
    %c0_i32 = arith.constant 0 : i32
    %c0_i32_0 = arith.constant 0 : i32
    %c0_i32_1 = arith.constant 0 : i32
    return %c0_i32, %c0_i32_0 : i32, i32
  }
  func.func @transform_3(%arg0: i32, %arg1: i32) -> (i32, i32) {
    %c0_i32 = arith.constant 0 : i32
    %c0_i32_0 = arith.constant 0 : i32
    %c0_i32_1 = arith.constant 0 : i32
    return %c0_i32, %c0_i32_0 : i32, i32
  }
  func.func @transform_4(%arg0: i32, %arg1: i32) -> (i32, i32) {
    %c0_i32 = arith.constant 0 : i32
    %c0_i32_0 = arith.constant 0 : i32
    %c0_i32_1 = arith.constant 0 : i32
    return %c0_i32, %c0_i32_0 : i32, i32
  }
  func.func @transform_5(%arg0: i32, %arg1: i32) -> (i32, i32) {
    %c0_i32 = arith.constant 0 : i32
    %c0_i32_0 = arith.constant 0 : i32
    %c0_i32_1 = arith.constant 0 : i32
    return %c0_i32, %c0_i32_0 : i32, i32
  }
  func.func @transform_6(%arg0: i32, %arg1: i32) -> (i32, i32) {
    %c0_i32 = arith.constant 0 : i32
    %c0_i32_0 = arith.constant 0 : i32
    %c0_i32_1 = arith.constant 0 : i32
    return %c0_i32, %c0_i32_0 : i32, i32
  }
  func.func @transform_7(%arg0: i32, %arg1: i32) -> (i32, i32) {
    %c0_i32 = arith.constant 0 : i32
    %c0_i32_0 = arith.constant 0 : i32
    %c0_i32_1 = arith.constant 0 : i32
    return %c0_i32, %c0_i32_0 : i32, i32
  }
  func.func @transform_8(%arg0: i32, %arg1: i32) -> (i32, i32) {
    %c0_i32 = arith.constant 0 : i32
    %c0_i32_0 = arith.constant 0 : i32
    %c0_i32_1 = arith.constant 0 : i32
    return %c0_i32, %c0_i32_0 : i32, i32
  }
  func.func @transform_9(%arg0: i32, %arg1: i32) -> (i32, i32) {
    %c0_i32 = arith.constant 0 : i32
    %c0_i32_0 = arith.constant 0 : i32
    %c0_i32_1 = arith.constant 0 : i32
    return %c0_i32, %c0_i32_0 : i32, i32
  }
  func.func @transform_10(%arg0: i32, %arg1: i32) -> (i32, i32, i32) {
    %c0_i32 = arith.constant 0 : i32
    %c0_i32_0 = arith.constant 0 : i32
    return %arg0, %c0_i32, %arg1 : i32, i32, i32
  }
}

</mosaic_0001>

<llo_original>
// kernel: tpu_custom_call.1
$region0: #{tpu_custom_call.1}
  #allocation0 [shape = 'u32[]', space=smem, size = 0x4, offset = 0x4, fixed_abs, tag = 'smem constant byte address 0x4 - core index']
  #allocation1 [shape = 'u32[144,128]{1,0:T(1,128)}', space=vmem, size = 0x12000, scoped, tag = 'internal scratch']
  %s0 = inlined_call_operand.vmem [shape: f32[2,4,262], index: 0, kind: input, shape index: {}]
  %s1 = inlined_call_operand.vmem [shape: f32[1,260], index: 1, kind: input, shape index: {}]
  %s2 = inlined_call_operand.vmem [shape: f32[6,12], index: 2, kind: input, shape index: {}]
  %s3 = inlined_call_operand.vmem [shape: f32[6,1], index: 3, kind: input, shape index: {}]
  %s4 = inlined_call_operand.vmem [shape: f32[6,1], index: 4, kind: input, shape index: {}]
  %s5 = inlined_call_operand.vmem [shape: f32[8,18], index: 5, kind: input, shape index: {}]
  %s6 = inlined_call_operand.vmem [shape: f32[8,1], index: 6, kind: input, shape index: {}]
  %s7 = inlined_call_operand.vmem [shape: f32[8,1], index: 7, kind: input, shape index: {}]
  %s8 = inlined_call_operand.vmem [shape: f32[8,4], index: 8, kind: input, shape index: {}]
  %s9 = inlined_call_operand.vmem [shape: f32[8,1], index: 9, kind: input, shape index: {}]
  %s10 = inlined_call_operand.hbm [shape: f32[2,8,256], index: 10, kind: output, shape index: {}]
  %s11 = sld [smem:[#allocation0]]
  $region73: #{tpu_custom_call.1} parent=0
    _
  %s13 = ssub.s32 1, %s11
  %s14 = scalar_select 0, %s13, %s11
  $region1: #{tpu_custom_call.1} parent=0
    #allocation2 [shape = 'u8[16384]{0}', space=vmem, size = 0x4000, scoped, tag = 'output window, operand 0']
    #allocation3 [shape = 's32[2]{0}', space=sflag, size = 0x8, scoped, tag = 'scoped memory for tpu_custom_call.1']
    %15 = vsyncpa [#allocation3], 0
    %s16 = scalar_lea.sflag [#allocation3], 1
    %17 = vsyncpa %s16, 0
    loop: start=0, step=1, limit=4
    $region2: #{tpu_custom_call.1} parent=1 // loop_pre_header
      _
    $region3: #{tpu_custom_call.1} parent=1 // loop_header
      %s19 = sphi 0, %s23
      %p20 = scmp.ge.s32.totalorder %s19, 4
      %s26 = sphi 0, %s38
      %s27 = sphi 0, %s34
      %s28 = sphi 0, %s26
      %s29 = sphi 0, %s27
      %s30 = sphi 0, %s28
      %s31 = sphi 0, %s29
      %s41 = sphi 0, %s43
      %s44 = sphi 0, %s41
      %s45 = sphi 0, %s44
      %s61 = sphi 0, %s45
      %s65 = sphi 0, %s65
      %s67 = sphi 0, %s65
      %s68 = sphi 0, %s67
      %s82 = sphi 0, %s68
      %s86 = sphi 0, %s86
      %s88 = sphi 0, %s86
      %s89 = sphi 0, %s88
      %s103 = sphi 0, %s89
      %s107 = sphi 0, %s107
      %s109 = sphi 0, %s107
      %s110 = sphi 0, %s109
      %s124 = sphi 0, %s110
      %s128 = sphi 0, %s128
      %s130 = sphi 0, %s128
      %s131 = sphi 0, %s130
      %s145 = sphi 0, %s131
      %s149 = sphi 0, %s149
      %s151 = sphi 0, %s149
      %s152 = sphi 0, %s151
      %s166 = sphi 0, %s152
      %s170 = sphi 0, %s170
      %s172 = sphi 0, %s170
      %s173 = sphi 0, %s172
      %s187 = sphi 0, %s173
      %s191 = sphi 0, %s191
      %s193 = sphi 0, %s191
      %s194 = sphi 0, %s193
      %s208 = sphi 0, %s194
      %s212 = sphi 0, %s212
      %s214 = sphi 0, %s212
      %s215 = sphi 0, %s214
      %s229 = sphi 0, %s215
      %s233 = sphi 0, %s233
      %s235 = sphi 0, %s233
      %s236 = sphi 0, %s235
      %s250 = sphi 0, %s236
      %s258 = sphi 0, %s260
      %s261 = sphi 0, %s258
      %s262 = sphi 0, %s261
      %s278 = sphi 0, %s262
    $region4: #{tpu_custom_call.1} parent=1 // loop_header_branch
      %22 = sbr.rel (%p20) target = $region8
    $region5: #{tpu_custom_call.1} parent=1 // loop_body
      %s24 = ssub.s32 %s19, 1
      %s25 = ssub.s32 %s19, 2
      %s32 = sadd.s32 1, %s27
      %p33 = scmp.ge.s32.totalorder %s32, 1
      %s34 = scalar_select %p33, 0, %s32
      %s35 = sadd.s32 1, %s26
      %s36 = scalar_select %p33, %s35, %s26
      %p37 = scmp.ge.s32.totalorder %s36, 2
      %s38 = scalar_select %p37, 0, %s36
      %s39 = ssub.s32 %s26, %s38
      %p40 = scmp.eq.s32.totalorder %s39, 0
      %s42 = sadd.s32 %s41, 1
      %s43 = scalar_select %p40, %s41, %s42
      %p46 = pneg %p40
      %p47 = scmp.eq.s32.totalorder %s19, 1
      %p48 = por %p46, %p47
      %p49 = scmp.ne.s32.totalorder %s41, %s44
      %p50 = scmp.eq.s32.totalorder %s19, 0
      %p51 = por %p49, %p50
      %p52 = scmp.ne.s32.totalorder %s41, %s44
      %p53 = scmp.eq.s32.totalorder %s24, 1
      %p54 = por %p52, %p53
      %p55 = scmp.ne.s32.totalorder %s44, %s45
      %p56 = scmp.eq.s32.totalorder %s24, 0
      %p57 = por %p55, %p56
      %p58 = scmp.ne.s32.totalorder %s44, %s45
      %p59 = scmp.eq.s32.totalorder %s25, 1
      %p60 = por %p58, %p59
      %p62 = scmp.ne.s32.totalorder %s45, %s61
      %p63 = scmp.eq.s32.totalorder %s25, 0
      %p64 = por %p62, %p63
      %s66 = sadd.s32 %s65, 1
      %p69 = scmp.eq.s32.totalorder %s19, 1
      %p70 = scmp.ne.s32.totalorder %s65, %s67
      %p71 = scmp.eq.s32.totalorder %s19, 0
      %p72 = por %p70, %p71
      %p73 = scmp.ne.s32.totalorder %s65, %s67
      %p74 = scmp.eq.s32.totalorder %s24, 1
      %p75 = por %p73, %p74
      %p76 = scmp.ne.s32.totalorder %s67, %s68
      %p77 = scmp.eq.s32.totalorder %s24, 0
      %p78 = por %p76, %p77
      %p79 = scmp.ne.s32.totalorder %s67, %s68
      %p80 = scmp.eq.s32.totalorder %s25, 1
      %p81 = por %p79, %p80
      %p83 = scmp.ne.s32.totalorder %s68, %s82
      %p84 = scmp.eq.s32.totalorder %s25, 0
      %p85 = por %p83, %p84
      %s87 = sadd.s32 %s86, 1
      %p90 = scmp.eq.s32.totalorder %s19, 1
      %p91 = scmp.ne.s32.totalorder %s86, %s88
      %p92 = scmp.eq.s32.totalorder %s19, 0
      %p93 = por %p91, %p92
      %p94 = scmp.ne.s32.totalorder %s86, %s88
      %p95 = scmp.eq.s32.totalorder %s24, 1
      %p96 = por %p94, %p95
      %p97 = scmp.ne.s32.totalorder %s88, %s89
      %p98 = scmp.eq.s32.totalorder %s24, 0
      %p99 = por %p97, %p98
      %p100 = scmp.ne.s32.totalorder %s88, %s89
      %p101 = scmp.eq.s32.totalorder %s25, 1
      %p102 = por %p100, %p101
      %p104 = scmp.ne.s32.totalorder %s89, %s103
      %p105 = scmp.eq.s32.totalorder %s25, 0
      %p106 = por %p104, %p105
      %s108 = sadd.s32 %s107, 1
      %p111 = scmp.eq.s32.totalorder %s19, 1
      %p112 = scmp.ne.s32.totalorder %s107, %s109
      %p113 = scmp.eq.s32.totalorder %s19, 0
      %p114 = por %p112, %p113
      %p115 = scmp.ne.s32.totalorder %s107, %s109
      %p116 = scmp.eq.s32.totalorder %s24, 1
      %p117 = por %p115, %p116
      %p118 = scmp.ne.s32.totalorder %s109, %s110
      %p119 = scmp.eq.s32.totalorder %s24, 0
      %p120 = por %p118, %p119
      %p121 = scmp.ne.s32.totalorder %s109, %s110
      %p122 = scmp.eq.s32.totalorder %s25, 1
      %p123 = por %p121, %p122
      %p125 = scmp.ne.s32.totalorder %s110, %s124
      %p126 = scmp.eq.s32.totalorder %s25, 0
      %p127 = por %p125, %p126
      %s129 = sadd.s32 %s128, 1
      %p132 = scmp.eq.s32.totalorder %s19, 1
      %p133 = scmp.ne.s32.totalorder %s128, %s130
      %p134 = scmp.eq.s32.totalorder %s19, 0
      %p135 = por %p133, %p134
      %p136 = scmp.ne.s32.totalorder %s128, %s130
      %p137 = scmp.eq.s32.totalorder %s24, 1
      %p138 = por %p136, %p137
      %p139 = scmp.ne.s32.totalorder %s130, %s131
      %p140 = scmp.eq.s32.totalorder %s24, 0
      %p141 = por %p139, %p140
      %p142 = scmp.ne.s32.totalorder %s130, %s131
      %p143 = scmp.eq.s32.totalorder %s25, 1
      %p144 = por %p142, %p143
      %p146 = scmp.ne.s32.totalorder %s131, %s145
      %p147 = scmp.eq.s32.totalorder %s25, 0
      %p148 = por %p146, %p147
      %s150 = sadd.s32 %s149, 1
      %p153 = scmp.eq.s32.totalorder %s19, 1
      %p154 = scmp.ne.s32.totalorder %s149, %s151
      %p155 = scmp.eq.s32.totalorder %s19, 0
      %p156 = por %p154, %p155
      %p157 = scmp.ne.s32.totalorder %s149, %s151
      %p158 = scmp.eq.s32.totalorder %s24, 1
      %p159 = por %p157, %p158
      %p160 = scmp.ne.s32.totalorder %s151, %s152
      %p161 = scmp.eq.s32.totalorder %s24, 0
      %p162 = por %p160, %p161
      %p163 = scmp.ne.s32.totalorder %s151, %s152
      %p164 = scmp.eq.s32.totalorder %s25, 1
      %p165 = por %p163, %p164
      %p167 = scmp.ne.s32.totalorder %s152, %s166
      %p168 = scmp.eq.s32.totalorder %s25, 0
      %p169 = por %p167, %p168
      %s171 = sadd.s32 %s170, 1
      %p174 = scmp.eq.s32.totalorder %s19, 1
      %p175 = scmp.ne.s32.totalorder %s170, %s172
      %p176 = scmp.eq.s32.totalorder %s19, 0
      %p177 = por %p175, %p176
      %p178 = scmp.ne.s32.totalorder %s170, %s172
      %p179 = scmp.eq.s32.totalorder %s24, 1
      %p180 = por %p178, %p179
      %p181 = scmp.ne.s32.totalorder %s172, %s173
      %p182 = scmp.eq.s32.totalorder %s24, 0
      %p183 = por %p181, %p182
      %p184 = scmp.ne.s32.totalorder %s172, %s173
      %p185 = scmp.eq.s32.totalorder %s25, 1
      %p186 = por %p184, %p185
      %p188 = scmp.ne.s32.totalorder %s173, %s187
      %p189 = scmp.eq.s32.totalorder %s25, 0
      %p190 = por %p188, %p189
      %s192 = sadd.s32 %s191, 1
      %p195 = scmp.eq.s32.totalorder %s19, 1
      %p196 = scmp.ne.s32.totalorder %s191, %s193
      %p197 = scmp.eq.s32.totalorder %s19, 0
      %p198 = por %p196, %p197
      %p199 = scmp.ne.s32.totalorder %s191, %s193
      %p200 = scmp.eq.s32.totalorder %s24, 1
      %p201 = por %p199, %p200
      %p202 = scmp.ne.s32.totalorder %s193, %s194
      %p203 = scmp.eq.s32.totalorder %s24, 0
      %p204 = por %p202, %p203
      %p205 = scmp.ne.s32.totalorder %s193, %s194
      %p206 = scmp.eq.s32.totalorder %s25, 1
      %p207 = por %p205, %p206
      %p209 = scmp.ne.s32.totalorder %s194, %s208
      %p210 = scmp.eq.s32.totalorder %s25, 0
      %p211 = por %p209, %p210
      %s213 = sadd.s32 %s212, 1
      %p216 = scmp.eq.s32.totalorder %s19, 1
      %p217 = scmp.ne.s32.totalorder %s212, %s214
      %p218 = scmp.eq.s32.totalorder %s19, 0
      %p219 = por %p217, %p218
      %p220 = scmp.ne.s32.totalorder %s212, %s214
      %p221 = scmp.eq.s32.totalorder %s24, 1
      %p222 = por %p220, %p221
      %p223 = scmp.ne.s32.totalorder %s214, %s215
      %p224 = scmp.eq.s32.totalorder %s24, 0
      %p225 = por %p223, %p224
      %p226 = scmp.ne.s32.totalorder %s214, %s215
      %p227 = scmp.eq.s32.totalorder %s25, 1
      %p228 = por %p226, %p227
      %p230 = scmp.ne.s32.totalorder %s215, %s229
      %p231 = scmp.eq.s32.totalorder %s25, 0
      %p232 = por %p230, %p231
      %s234 = sadd.s32 %s233, 1
      %p237 = scmp.eq.s32.totalorder %s19, 1
      %p238 = scmp.ne.s32.totalorder %s233, %s235
      %p239 = scmp.eq.s32.totalorder %s19, 0
      %p240 = por %p238, %p239
      %p241 = scmp.ne.s32.totalorder %s233, %s235
      %p242 = scmp.eq.s32.totalorder %s24, 1
      %p243 = por %p241, %p242
      %p244 = scmp.ne.s32.totalorder %s235, %s236
      %p245 = scmp.eq.s32.totalorder %s24, 0
      %p246 = por %p244, %p245
      %p247 = scmp.ne.s32.totalorder %s235, %s236
      %p248 = scmp.eq.s32.totalorder %s25, 1
      %p249 = por %p247, %p248
      %p251 = scmp.ne.s32.totalorder %s236, %s250
      %p252 = scmp.eq.s32.totalorder %s25, 0
      %p253 = por %p251, %p252
      %s254 = ssub.s32 %s26, %s38
      %s255 = ssub.s32 %s27, %s34
      %s256 = sor.u32 %s254, %s255
      %p257 = scmp.eq.s32.totalorder %s256, 0
      %s259 = sadd.s32 %s258, 1
      %s260 = scalar_select %p257, %s258, %s259
      %p263 = pneg %p257
      %p264 = scmp.eq.s32.totalorder %s19, 1
      %p265 = por %p263, %p264
      %p266 = scmp.ne.s32.totalorder %s258, %s261
      %p267 = scmp.eq.s32.totalorder %s19, 0
      %p268 = por %p266, %p267
      %p269 = scmp.ne.s32.totalorder %s258, %s261
      %p270 = scmp.eq.s32.totalorder %s24, 1
      %p271 = por %p269, %p270
      %p272 = scmp.ne.s32.totalorder %s261, %s262
      %p273 = scmp.eq.s32.totalorder %s24, 0
      %p274 = por %p272, %p273
      %p275 = scmp.ne.s32.totalorder %s261, %s262
      %p276 = scmp.eq.s32.totalorder %s25, 1
      %p277 = por %p275, %p276
      %p279 = scmp.ne.s32.totalorder %s262, %s278
      %p280 = scmp.eq.s32.totalorder %s25, 0
      %p281 = por %p279, %p280
      %p282 = scmp.le.s32.totalorder 1, %s19
      %p283 = scmp.lt.s32.totalorder %s19, 3
      %p284 = pnand %p282, %p283
      %p285 = pneg %p284
      // Predicated region
      $region9: #{tpu_custom_call.1} parent=5 // pred_check
        _
      $region10: #{tpu_custom_call.1} parent=5 // pred_check_branch
        %287 = sbr.rel (%p284) target = $region12
      $region11: #{tpu_custom_call.1} parent=5 // pred_region
        %s288 = ssub.s32 %s19, 1
        // Predicated region
        $region13: #{tpu_custom_call.1} parent=11 // pred_check
          %p289 = pneg %p78
        $region14: #{tpu_custom_call.1} parent=11 // pred_check_branch
          %291 = sbr.rel (%p289) target = $region16
        $region15: #{tpu_custom_call.1} parent=11 // pred_region
          _
        $region16: #{tpu_custom_call.1} parent=11 // pred_fallthru
          _
        // Predicated region
        $region17: #{tpu_custom_call.1} parent=11 // pred_check
          %p292 = pneg %p99
        $region18: #{tpu_custom_call.1} parent=11 // pred_check_branch
          %294 = sbr.rel (%p292) target = $region20
        $region19: #{tpu_custom_call.1} parent=11 // pred_region
          _
        $region20: #{tpu_custom_call.1} parent=11 // pred_fallthru
          _
        // Predicated region
        $region21: #{tpu_custom_call.1} parent=11 // pred_check
          %p295 = pneg %p120
        $region22: #{tpu_custom_call.1} parent=11 // pred_check_branch
          %297 = sbr.rel (%p295) target = $region24
        $region23: #{tpu_custom_call.1} parent=11 // pred_region
          _
        $region24: #{tpu_custom_call.1} parent=11 // pred_fallthru
          _
        // Predicated region
        $region25: #{tpu_custom_call.1} parent=11 // pred_check
          %p298 = pneg %p141
        $region26: #{tpu_custom_call.1} parent=11 // pred_check_branch
          %300 = sbr.rel (%p298) target = $region28
        $region27: #{tpu_custom_call.1} parent=11 // pred_region
          _
        $region28: #{tpu_custom_call.1} parent=11 // pred_fallthru
          _
        // Predicated region
        $region29: #{tpu_custom_call.1} parent=11 // pred_check
          %p301 = pneg %p162
        $region30: #{tpu_custom_call.1} parent=11 // pred_check_branch
          %303 = sbr.rel (%p301) target = $region32
        $region31: #{tpu_custom_call.1} parent=11 // pred_region
          _
        $region32: #{tpu_custom_call.1} parent=11 // pred_fallthru
          _
        // Predicated region
        $region33: #{tpu_custom_call.1} parent=11 // pred_check
          %p304 = pneg %p183
        $region34: #{tpu_custom_call.1} parent=11 // pred_check_branch
          %306 = sbr.rel (%p304) target = $region36
        $region35: #{tpu_custom_call.1} parent=11 // pred_region
          _
        $region36: #{tpu_custom_call.1} parent=11 // pred_fallthru
          _
        // Predicated region
        $region37: #{tpu_custom_call.1} parent=11 // pred_check
          %p307 = pneg %p204
        $region38: #{tpu_custom_call.1} parent=11 // pred_check_branch
          %309 = sbr.rel (%p307) target = $region40
        $region39: #{tpu_custom_call.1} parent=11 // pred_region
          _
        $region40: #{tpu_custom_call.1} parent=11 // pred_fallthru
          _
        // Predicated region
        $region41: #{tpu_custom_call.1} parent=11 // pred_check
          %p310 = pneg %p225
        $region42: #{tpu_custom_call.1} parent=11 // pred_check_branch
          %312 = sbr.rel (%p310) target = $region44
        $region43: #{tpu_custom_call.1} parent=11 // pred_region
          _
        $region44: #{tpu_custom_call.1} parent=11 // pred_fallthru
          _
        // Predicated region
        $region45: #{tpu_custom_call.1} parent=11 // pred_check
          %p313 = pneg %p246
        $region46: #{tpu_custom_call.1} parent=11 // pred_check_branch
          %315 = sbr.rel (%p313) target = $region48
        $region47: #{tpu_custom_call.1} parent=11 // pred_region
          _
        $region48: #{tpu_custom_call.1} parent=11 // pred_fallthru
          _
      $region12: #{tpu_custom_call.1} parent=5 // pred_fallthru
        _
      %p316 = scmp.lt.s32.totalorder %s19, 2
      // Predicated region
      $region49: #{tpu_custom_call.1} parent=5 // pred_check
        %p317 = pneg %p316
      $region50: #{tpu_custom_call.1} parent=5 // pred_check_branch
        %319 = sbr.rel (%p317) target = $region52
      $region51: #{tpu_custom_call.1} parent=5 // pred_region
        // Predicated region
        $region53: #{tpu_custom_call.1} parent=51 // pred_check
          %p320 = pneg %p51
        $region54: #{tpu_custom_call.1} parent=51 // pred_check_branch
          %322 = sbr.rel (%p320) target = $region56
        $region55: #{tpu_custom_call.1} parent=51 // pred_region
          %p323 = scmp.lt.s32.totalorder %s26, 1
          %s324 = scalar_select %p323, %s26, 1
          %s325 = smul.addr %s324, 3
          %s326 = smul.addr %s325, 4
          %s327 = scalar_lea.vmem %s0, %s326
        $region56: #{tpu_custom_call.1} parent=51 // pred_fallthru
          _
      $region52: #{tpu_custom_call.1} parent=5 // pred_fallthru
        _
      %p328 = scmp.le.s32.totalorder 1, %s19
      %p329 = scmp.lt.s32.totalorder %s19, 3
      %p330 = pnand %p328, %p329
      %p331 = pneg %p330
      // Predicated region
      $region57: #{tpu_custom_call.1} parent=5 // pred_check
        _
      $region58: #{tpu_custom_call.1} parent=5 // pred_check_branch
        %333 = sbr.rel (%p330) target = $region60
      $region59: #{tpu_custom_call.1} parent=5 // pred_region
        %s334 = ssub.s32 %s19, 1
        %p335 = scmp.lt.s32.totalorder %s28, 1
        %s336 = scalar_select %p335, %s28, 1
        %s337 = smul.addr %s336, 3
        %s338 = smul.addr %s337, 4
        %s339 = scalar_lea.vmem %s0, %s338
        %p340 = pneg %p57
        %p341 = pneg %p54
        %p342 = pneg %p78
        %p343 = pneg %p75
        %p344 = pneg %p99
        %p345 = pneg %p96
        %p346 = pneg %p120
        %p347 = pneg %p117
        %p348 = pneg %p141
        %p349 = pneg %p138
        %p350 = pneg %p162
        %p351 = pneg %p159
        %p352 = pneg %p183
        %p353 = pneg %p180
        %p354 = pneg %p204
        %p355 = pneg %p201
        %p356 = pneg %p225
        %p357 = pneg %p222
        %p358 = pneg %p246
        %p359 = pneg %p243
        %p360 = pneg %p274
        %p361 = pneg %p271
        %s362 = sand.u32 %s261, 1
        %s363 = scalar_lea.sflag [#allocation3], %s362
        %s364 = sand.u32 %s261, 1
        %s365 = smul.addr %s364, 16
        %s366 = scalar_lea.vmem [#allocation2], %s365
        %p367 = scmp.lt.s32.totalorder %s28, 1
        %s368 = scalar_select %p367, %s28, 1
        %s369 = smul.addr %s368, 3
        %s370 = smul.addr %s369, 4
        %s371 = scalar_lea.vmem %s0, %s370
        %s372 = smul.u32 2, %s29
        %s373 = smul.u32 %s29, 256
        %s374 = sshra.s32 %s373, 7
        %s375 = sand.u32 %s373, 127
        %s376 = smul.addr %s374, 4
        %s377 = scalar_lea.vmem %s371, %s376
        %v378 = vld [vmem:[%s377] sm:$0xff]
        %v379 = vld [vmem:[%s377 + $0x8] sm:$0xf]
        %v382 = vcombine.high %v378, %v378
        %v384 = vcombine.low %v378, %v378
        %v385 = vcombine.low %v379, %v379
        %386 = vrot.lane.b32.xlu0 %v384, 127
        %v387 = vpop.permute.xlu0 %386
        %388 = vrot.lane.b32.xlu0 %v378, 127
        %v389 = vpop.permute.xlu0 %388
        %390 = vrot.lane.b32.xlu0 %v385, 127
        %v391 = vpop.permute.xlu0 %390
        %vm392 = vcmask 1039360
        %v393 = vsel %vm392, %v387, %v389
        %v394 = vsel %vm392, %v389, %v391
        %398 = vrot.lane.b32.xlu0 %v378, 126
        %v399 = vpop.permute.xlu0 %398
        %400 = vrot.lane.b32.xlu0 %v382, 126
        %v401 = vpop.permute.xlu0 %400
        %402 = vrot.lane.b32.xlu0 %v379, 126
        %v403 = vpop.permute.xlu0 %402
        %vm404 = vcmask 1031168
        %v405 = vsel %vm404, %v399, %v401
        %v406 = vsel %vm404, %v401, %v403
        %vm407 = vcmask 1043456
        %v408 = vsel %vm407, %v378, %v393
        %v409 = vsel %vm407, %v382, %v394
        %v410 = vsel %vm407, %v379, %v391
        %v411 = vld [vmem:[%s2] sm:$0x3f]
        %v412 = vld [vmem:[%s3] sm:$0x3f]
        %414 = vset.pattern.permute.xlu0 0
        %415 = vperm.xlu0 %414, %v412
        %v416 = vpop.permute.xlu0 %415
        %vm418 = vcmask 97280
        %v420 = vsel %vm418, %v411, 0
        %v422 = vsel %vm407, %v405, 0
        %v424 = vsel %vm407, %v406, 0
        %v426 = vsel %vm407, %v403, 0
        %428 = vmatprep.subr.mxu0 %v409
        %429 = vmatpush1.msra.mxu0 %v408
        %430 = vmatprep.subr.mxu0 %v424
        %431 = vmatpush1.msra.mxu0 %v422
        %432 = vmatprep.subr.mxu0 0.0
        %433 = vmatpush1.msra.mxu0 0.0
        %434 = vmatprep.subr.mxu0 0.0
        %435 = vmatpush1.msra.mxu0 0.0
        %436 = vmatprep.subr.mxu0 0.0
        %437 = vmatpush1.msra.mxu0 0.0
        %438 = vmatprep.subr.mxu0 0.0
        %439 = vmatpush1.msra.mxu0 0.0
        %440 = vmatprep.subr.mxu0 0.0
        %441 = vmatpush1.msra.mxu0 0.0
        %442 = vmatprep.subr.mxu0 0.0
        %443 = vmatpush1.msra.mxu0 0.0
        %444 = vmatprep.subr.mxu0 0.0
        %445 = vmatpush1.msra.mxu0 0.0
        %446 = vmatprep.subr.mxu0 0.0
        %447 = vmatpush1.msra.mxu0 0.0
        %448 = vmatprep.subr.mxu0 0.0
        %449 = vmatpush1.msra.mxu0 0.0
        %450 = vmatprep.subr.mxu0 0.0
        %451 = vmatpush1.msra.mxu0 0.0
        %452 = vmatprep.subr.mxu0 0.0
        %453 = vmatpush1.msra.mxu0 0.0
        %454 = vmatprep.subr.mxu0 0.0
        %455 = vmatpush1.msra.mxu0 0.0
        %456 = vmatprep.subr.mxu0 0.0
        %457 = vmatpush1.msra.mxu0 0.0
        %458 = vmatprep.subr.mxu0 0.0
        %459 = vmatpush1.msra.mxu0 0.0
        %460 = vmatprep.subr.mxu0 0.0
        %461 = vmatpush1.msra.mxu0 0.0
        %462 = vmatprep.subr.mxu0 0.0
        %463 = vmatpush1.msra.mxu0 0.0
        %464 = vmatprep.subr.mxu0 0.0
        %465 = vmatpush1.msra.mxu0 0.0
        %466 = vmatprep.subr.mxu0 0.0
        %467 = vmatpush1.msra.mxu0 0.0
        %468 = vmatprep.subr.mxu0 0.0
        %469 = vmatpush1.msra.mxu0 0.0
        %470 = vmatprep.subr.mxu0 0.0
        %471 = vmatpush1.msra.mxu0 0.0
        %472 = vmatprep.subr.mxu0 0.0
        %473 = vmatpush1.msra.mxu0 0.0
        %474 = vmatprep.subr.mxu0 0.0
        %475 = vmatpush1.msra.mxu0 0.0
        %476 = vmatprep.subr.mxu0 0.0
        %477 = vmatpush1.msra.mxu0 0.0
        %478 = vmatprep.subr.mxu0 0.0
        %479 = vmatpush1.msra.mxu0 0.0
        %480 = vmatprep.subr.mxu0 0.0
        %481 = vmatpush1.msra.mxu0 0.0
        %482 = vmatprep.subr.mxu0 0.0
        %483 = vmatpush1.msra.mxu0 0.0
        %484 = vmatprep.subr.mxu0 0.0
        %485 = vmatpush1.msra.mxu0 0.0
        %486 = vmatprep.subr.mxu0 0.0
        %487 = vmatpush1.msra.mxu0 0.0
        %488 = vmatprep.subr.mxu0 0.0
        %489 = vmatpush1.msra.mxu0 0.0
        %490 = vmatprep.subr.mxu0 0.0
        %491 = vmatpush1.msra.mxu0 0.0
        %492 = vmatprep.mubr.f32.mxu0 0.0
        %493 = vmatmul.mubr.f32.gmra.mrb[0].mxu0 %v420
        %v494 = vpop.f32.mrb[0].mxu0
        %v495 = vadd.f32 %v416, %v494
        %v496 = vpop.f32.mrb[0].mxu0
        %v497 = vadd.f32 %v416, %v496
        %498 = vdwg.mxu0
        %499 = vmatprep.subr.mxu0 0.0
        %500 = vmatpush1.msra.mxu0 %v410
        %501 = vmatprep.subr.mxu0 0.0
        %502 = vmatpush1.msra.mxu0 %v426
        %503 = vmatprep.subr.mxu0 0.0
        %504 = vmatpush1.msra.mxu0 0.0
        %505 = vmatprep.subr.mxu0 0.0
        %506 = vmatpush1.msra.mxu0 0.0
        %507 = vmatprep.subr.mxu0 0.0
        %508 = vmatpush1.msra.mxu0 0.0
        %509 = vmatprep.subr.mxu0 0.0
        %510 = vmatpush1.msra.mxu0 0.0
        %511 = vmatprep.subr.mxu0 0.0
        %512 = vmatpush1.msra.mxu0 0.0
        %513 = vmatprep.subr.mxu0 0.0
        %514 = vmatpush1.msra.mxu0 0.0
        %515 = vmatprep.subr.mxu0 0.0
        %516 = vmatpush1.msra.mxu0 0.0
        %517 = vmatprep.subr.mxu0 0.0
        %518 = vmatpush1.msra.mxu0 0.0
        %519 = vmatprep.subr.mxu0 0.0
        %520 = vmatpush1.msra.mxu0 0.0
        %521 = vmatprep.subr.mxu0 0.0
        %522 = vmatpush1.msra.mxu0 0.0
        %523 = vmatprep.subr.mxu0 0.0
        %524 = vmatpush1.msra.mxu0 0.0
        %525 = vmatprep.subr.mxu0 0.0
        %526 = vmatpush1.msra.mxu0 0.0
        %527 = vmatprep.subr.mxu0 0.0
        %528 = vmatpush1.msra.mxu0 0.0
        %529 = vmatprep.subr.mxu0 0.0
        %530 = vmatpush1.msra.mxu0 0.0
        %531 = vmatprep.subr.mxu0 0.0
        %532 = vmatpush1.msra.mxu0 0.0
        %533 = vmatprep.subr.mxu0 0.0
        %534 = vmatpush1.msra.mxu0 0.0
        %535 = vmatprep.subr.mxu0 0.0
        %536 = vmatpush1.msra.mxu0 0.0
        %537 = vmatprep.subr.mxu0 0.0
        %538 = vmatpush1.msra.mxu0 0.0
        %539 = vmatprep.subr.mxu0 0.0
        %540 = vmatpush1.msra.mxu0 0.0
        %541 = vmatprep.subr.mxu0 0.0
        %542 = vmatpush1.msra.mxu0 0.0
        %543 = vmatprep.subr.mxu0 0.0
        %544 = vmatpush1.msra.mxu0 0.0
        %545 = vmatprep.subr.mxu0 0.0
        %546 = vmatpush1.msra.mxu0 0.0
        %547 = vmatprep.subr.mxu0 0.0
        %548 = vmatpush1.msra.mxu0 0.0
        %549 = vmatprep.subr.mxu0 0.0
        %550 = vmatpush1.msra.mxu0 0.0
        %551 = vmatprep.subr.mxu0 0.0
        %552 = vmatpush1.msra.mxu0 0.0
        %553 = vmatprep.subr.mxu0 0.0
        %554 = vmatpush1.msra.mxu0 0.0
        %555 = vmatprep.subr.mxu0 0.0
        %556 = vmatpush1.msra.mxu0 0.0
        %557 = vmatprep.subr.mxu0 0.0
        %558 = vmatpush1.msra.mxu0 0.0
        %559 = vmatprep.subr.mxu0 0.0
        %560 = vmatpush1.msra.mxu0 0.0
        %561 = vmatprep.subr.mxu0 0.0
        %562 = vmatpush1.msra.mxu0 0.0
        %563 = vmatprep.mubr.f32.mxu0 0.0
        %564 = vmatmul.mubr.f32.gmra.mrb[0].mxu0 %v420
        %v565 = vpop.f32.mrb[0].mxu0
        %v566 = vadd.f32 %v416, %v565
        %v567 = vpop.f32.mrb[0].mxu0
        %568 = vdwg.mxu0
        %vm569 = vcmp.ge.f32.partialorder %v495, 0.0
        %vm570 = vcmp.ge.f32.partialorder %v497, 0.0
        %vm571 = vcmp.ge.f32.partialorder %v566, 0.0
        %v572 = vld [vmem:[%s4] sm:$0x3f]
        %574 = vset.pattern.permute.xlu0 0
        %575 = vperm.xlu0 %574, %v572
        %v576 = vpop.permute.xlu0 %575
        %v578 = vmul.f32 %v576, %v495
        %v579 = vmul.f32 %v576, %v497
        %v580 = vmul.f32 %v576, %v566
        %v581 = vsel %vm569, %v495, %v578
        %v582 = vsel %vm570, %v497, %v579
        %v583 = vsel %vm571, %v566, %v580
        %s584 = scalar_lea.vmem %s1, %s374
        %v585 = vld [vmem:[%s584] sm:$0x7]
        %v587 = vlaneseq
        %v588 = vshrl.u32 %v587, 7
        %v589 = vsub.s32 0, %v588
        %v590 = vrot.slane %v585, %v589
        %v591 = vlaneseq
        %v592 = vshrl.u32 %v591, 7
        %v593 = vsub.s32 1, %v592
        %v594 = vrot.slane %v585, %v593
        %v595 = vlaneseq
        %v596 = vshrl.u32 %v595, 7
        %v597 = vsub.s32 2, %v596
        %v598 = vrot.slane %v585, %v597
        %v602 = vmul.f32 %v581, %v590
        %v603 = vmul.f32 %v582, %v594
        %v604 = vmul.f32 %v583, %v598
        %v608 = vrot.slane %v602, 2
        %v609 = vrot.slane %v603, 2
        %v610 = vrot.slane %v604, 2
        %611 = vrot.lane.b32.xlu0 %v608, 126
        %v612 = vpop.permute.xlu0 %611
        %613 = vrot.lane.b32.xlu0 %v609, 126
        %v614 = vpop.permute.xlu0 %613
        %615 = vrot.lane.b32.xlu0 %v610, 126
        %v616 = vpop.permute.xlu0 %615
        %v617 = vsel %vm404, %v612, %v614
        %v618 = vsel %vm404, %v614, %v616
        %v621 = vrot.slane %v602, 4
        %v622 = vrot.slane %v603, 4
        %v623 = vrot.slane %v604, 4
        %624 = vrot.lane.b32.xlu0 %v621, 124
        %v625 = vpop.permute.xlu0 %624
        %626 = vrot.lane.b32.xlu0 %v622, 124
        %v627 = vpop.permute.xlu0 %626
        %628 = vrot.lane.b32.xlu0 %v623, 124
        %v629 = vpop.permute.xlu0 %628
        %vm630 = vcmask 1014784
        %v631 = vsel %vm630, %v625, %v627
        %v632 = vsel %vm630, %v627, %v629
        %vm635 = vcmask 1045504
        %v636 = vsel %vm635, %v602, %v617
        %v637 = vsel %vm635, %v603, %v618
        %v638 = vsel %vm407, %v617, %v631
        %v639 = vsel %vm407, %v618, %v632
        %v640 = vld [vmem:[%s5] sm:$0xff]
        %v641 = vld [vmem:[%s6] sm:$0xff]
        %643 = vset.pattern.permute.xlu0 0
        %644 = vperm.xlu0 %643, %v641
        %v645 = vpop.permute.xlu0 %644
        %vm647 = vcmask 146432
        %v649 = vsel %vm647, %v640, 0
        %vm651 = vcmask 1041408
        %v652 = vsel %vm651, %v631, 0
        %v654 = vsel %vm651, %v632, 0
        %656 = vmatprep.subr.mxu0 %v637
        %657 = vmatpush1.msra.mxu0 %v636
        %658 = vmatprep.subr.mxu0 %v639
        %659 = vmatpush1.msra.mxu0 %v638
        %660 = vmatprep.subr.mxu0 %v654
        %661 = vmatpush1.msra.mxu0 %v652
        %662 = vmatprep.subr.mxu0 0.0
        %663 = vmatpush1.msra.mxu0 0.0
        %664 = vmatprep.subr.mxu0 0.0
        %665 = vmatpush1.msra.mxu0 0.0
        %666 = vmatprep.subr.mxu0 0.0
        %667 = vmatpush1.msra.mxu0 0.0
        %668 = vmatprep.subr.mxu0 0.0
        %669 = vmatpush1.msra.mxu0 0.0
        %670 = vmatprep.subr.mxu0 0.0
        %671 = vmatpush1.msra.mxu0 0.0
        %672 = vmatprep.subr.mxu0 0.0
        %673 = vmatpush1.msra.mxu0 0.0
        %674 = vmatprep.subr.mxu0 0.0
        %675 = vmatpush1.msra.mxu0 0.0
        %676 = vmatprep.subr.mxu0 0.0
        %677 = vmatpush1.msra.mxu0 0.0
        %678 = vmatprep.subr.mxu0 0.0
        %679 = vmatpush1.msra.mxu0 0.0
        %680 = vmatprep.subr.mxu0 0.0
        %681 = vmatpush1.msra.mxu0 0.0
        %682 = vmatprep.subr.mxu0 0.0
        %683 = vmatpush1.msra.mxu0 0.0
        %684 = vmatprep.subr.mxu0 0.0
        %685 = vmatpush1.msra.mxu0 0.0
        %686 = vmatprep.subr.mxu0 0.0
        %687 = vmatpush1.msra.mxu0 0.0
        %688 = vmatprep.subr.mxu0 0.0
        %689 = vmatpush1.msra.mxu0 0.0
        %690 = vmatprep.subr.mxu0 0.0
        %691 = vmatpush1.msra.mxu0 0.0
        %692 = vmatprep.subr.mxu0 0.0
        %693 = vmatpush1.msra.mxu0 0.0
        %694 = vmatprep.subr.mxu0 0.0
        %695 = vmatpush1.msra.mxu0 0.0
        %696 = vmatprep.subr.mxu0 0.0
        %697 = vmatpush1.msra.mxu0 0.0
        %698 = vmatprep.subr.mxu0 0.0
        %699 = vmatpush1.msra.mxu0 0.0
        %700 = vmatprep.subr.mxu0 0.0
        %701 = vmatpush1.msra.mxu0 0.0
        %702 = vmatprep.subr.mxu0 0.0
        %703 = vmatpush1.msra.mxu0 0.0
        %704 = vmatprep.subr.mxu0 0.0
        %705 = vmatpush1.msra.mxu0 0.0
        %706 = vmatprep.subr.mxu0 0.0
        %707 = vmatpush1.msra.mxu0 0.0
        %708 = vmatprep.subr.mxu0 0.0
        %709 = vmatpush1.msra.mxu0 0.0
        %710 = vmatprep.subr.mxu0 0.0
        %711 = vmatpush1.msra.mxu0 0.0
        %712 = vmatprep.subr.mxu0 0.0
        %713 = vmatpush1.msra.mxu0 0.0
        %714 = vmatprep.subr.mxu0 0.0
        %715 = vmatpush1.msra.mxu0 0.0
        %716 = vmatprep.subr.mxu0 0.0
        %717 = vmatpush1.msra.mxu0 0.0
        %718 = vmatprep.subr.mxu0 0.0
        %719 = vmatpush1.msra.mxu0 0.0
        %720 = vmatprep.mubr.f32.mxu0 0.0
        %721 = vmatmul.mubr.f32.gmra.mrb[0].mxu0 %v649
        %v722 = vpop.f32.mrb[0].mxu0
        %v723 = vadd.f32 %v645, %v722
        %v724 = vpop.f32.mrb[0].mxu0
        %v725 = vadd.f32 %v645, %v724
        %726 = vdwg.mxu0
        %vm727 = vcmp.ge.f32.partialorder %v723, 0.0
        %vm728 = vcmp.ge.f32.partialorder %v725, 0.0
        %v729 = vld [vmem:[%s7] sm:$0xff]
        %731 = vset.pattern.permute.xlu0 0
        %732 = vperm.xlu0 %731, %v729
        %v733 = vpop.permute.xlu0 %732
        %v735 = vmul.f32 %v733, %v723
        %v736 = vmul.f32 %v733, %v725
        %v737 = vsel %vm727, %v723, %v735
        %v738 = vsel %vm728, %v725, %v736
        %v739 = vld [vmem:[%s8] sm:$0xff]
        %v740 = vld [vmem:[%s9] sm:$0xff]
        %742 = vset.pattern.permute.xlu0 0
        %743 = vperm.xlu0 %742, %v740
        %v744 = vpop.permute.xlu0 %743
        %746 = vrot.lane.b32.xlu0 %v378, 125
        %v747 = vpop.permute.xlu0 %746
        %748 = vrot.lane.b32.xlu0 %v382, 125
        %v749 = vpop.permute.xlu0 %748
        %750 = vrot.lane.b32.xlu0 %v379, 125
        %v751 = vpop.permute.xlu0 %750
        %vm752 = vcmask 1022976
        %v753 = vsel %vm752, %v747, %v749
        %v754 = vsel %vm752, %v749, %v751
        %vm755 = vcmask 31744
        %v757 = vsel %vm755, %v739, 0
        %v759 = vsel %vm407, %v753, 0
        %v761 = vsel %vm407, %v754, 0
        %763 = vmatprep.subr.mxu0 %v761
        %764 = vmatpush1.msra.mxu0 %v759
        %765 = vmatprep.subr.mxu0 0.0
        %766 = vmatpush1.msra.mxu0 0.0
        %767 = vmatprep.subr.mxu0 0.0
        %768 = vmatpush1.msra.mxu0 0.0
        %769 = vmatprep.subr.mxu0 0.0
        %770 = vmatpush1.msra.mxu0 0.0
        %771 = vmatprep.subr.mxu0 0.0
        %772 = vmatpush1.msra.mxu0 0.0
        %773 = vmatprep.subr.mxu0 0.0
        %774 = vmatpush1.msra.mxu0 0.0
        %775 = vmatprep.subr.mxu0 0.0
        %776 = vmatpush1.msra.mxu0 0.0
        %777 = vmatprep.subr.mxu0 0.0
        %778 = vmatpush1.msra.mxu0 0.0
        %779 = vmatprep.subr.mxu0 0.0
        %780 = vmatpush1.msra.mxu0 0.0
        %781 = vmatprep.subr.mxu0 0.0
        %782 = vmatpush1.msra.mxu0 0.0
        %783 = vmatprep.subr.mxu0 0.0
        %784 = vmatpush1.msra.mxu0 0.0
        %785 = vmatprep.subr.mxu0 0.0
        %786 = vmatpush1.msra.mxu0 0.0
        %787 = vmatprep.subr.mxu0 0.0
        %788 = vmatpush1.msra.mxu0 0.0
        %789 = vmatprep.subr.mxu0 0.0
        %790 = vmatpush1.msra.mxu0 0.0
        %791 = vmatprep.subr.mxu0 0.0
        %792 = vmatpush1.msra.mxu0 0.0
        %793 = vmatprep.subr.mxu0 0.0
        %794 = vmatpush1.msra.mxu0 0.0
        %795 = vmatprep.subr.mxu0 0.0
        %796 = vmatpush1.msra.mxu0 0.0
        %797 = vmatprep.subr.mxu0 0.0
        %798 = vmatpush1.msra.mxu0 0.0
        %799 = vmatprep.subr.mxu0 0.0
        %800 = vmatpush1.msra.mxu0 0.0
        %801 = vmatprep.subr.mxu0 0.0
        %802 = vmatpush1.msra.mxu0 0.0
        %803 = vmatprep.subr.mxu0 0.0
        %804 = vmatpush1.msra.mxu0 0.0
        %805 = vmatprep.subr.mxu0 0.0
        %806 = vmatpush1.msra.mxu0 0.0
        %807 = vmatprep.subr.mxu0 0.0
        %808 = vmatpush1.msra.mxu0 0.0
        %809 = vmatprep.subr.mxu0 0.0
        %810 = vmatpush1.msra.mxu0 0.0
        %811 = vmatprep.subr.mxu0 0.0
        %812 = vmatpush1.msra.mxu0 0.0
        %813 = vmatprep.subr.mxu0 0.0
        %814 = vmatpush1.msra.mxu0 0.0
        %815 = vmatprep.subr.mxu0 0.0
        %816 = vmatpush1.msra.mxu0 0.0
        %817 = vmatprep.subr.mxu0 0.0
        %818 = vmatpush1.msra.mxu0 0.0
        %819 = vmatprep.subr.mxu0 0.0
        %820 = vmatpush1.msra.mxu0 0.0
        %821 = vmatprep.subr.mxu0 0.0
        %822 = vmatpush1.msra.mxu0 0.0
        %823 = vmatprep.subr.mxu0 0.0
        %824 = vmatpush1.msra.mxu0 0.0
        %825 = vmatprep.subr.mxu0 0.0
        %826 = vmatpush1.msra.mxu0 0.0
        %827 = vmatprep.mubr.f32.mxu0 0.0
        %828 = vmatmul.mubr.f32.gmra.mrb[0].mxu0 %v757
        %v829 = vpop.f32.mrb[0].mxu0
        %v830 = vadd.f32 %v744, %v829
        %v831 = vpop.f32.mrb[0].mxu0
        %v832 = vadd.f32 %v744, %v831
        %833 = vdwg.mxu0
        %v834 = vadd.f32 %v737, %v830
        %v835 = vadd.f32 %v738, %v832
        %836 = vst [vmem:[%s366] sm:$0xff] %v834
        %837 = vst [vmem:[%s366 + $0x8] sm:$0xff] %v835
        %s838 = sand.u32 %s261, 1
        %s839 = scalar_lea.sflag [#allocation3], %s838
        %s840 = sand.u32 %s261, 1
        %s841 = smul.addr %s840, 16
        %s842 = scalar_lea.vmem [#allocation2], %s841
        // Predicated region
        $region61: #{tpu_custom_call.1} parent=59 // pred_check
          %p843 = pneg %p271
        $region62: #{tpu_custom_call.1} parent=59 // pred_check_branch
          %845 = sbr.rel (%p843) target = $region64
        $region63: #{tpu_custom_call.1} parent=59 // pred_region
          %s846 = smul.u32 2, %s29
          %s848 = ssub.s32 256, 256
          %849 = vsyncadd %s839, %s848
          %s850 = smul.addr %s28, 2
          %s851 = sadd.s32 %s846, %s850
          %s852 = smul.addr %s851, 128
          %s853 = scalar_lea.hbm %s10, %s852
          %s855 = sshll.u32 %s842, 4
          %s856 = int_to_ptr.vmem [resolvable:$true] %s855
          %858 = dma.vmem_to_hbm [thread:$0]  %s856, 256, %s853, %s839
        $region64: #{tpu_custom_call.1} parent=59 // pred_fallthru
          _
      $region60: #{tpu_custom_call.1} parent=5 // pred_fallthru
        _
      %p859 = scmp.le.s32.totalorder 2, %s19
      // Predicated region
      $region65: #{tpu_custom_call.1} parent=5 // pred_check
        %p860 = pneg %p859
      $region66: #{tpu_custom_call.1} parent=5 // pred_check_branch
        %862 = sbr.rel (%p860) target = $region68
      $region67: #{tpu_custom_call.1} parent=5 // pred_region
        %s863 = ssub.s32 %s19, 2
        // Predicated region
        $region69: #{tpu_custom_call.1} parent=67 // pred_check
          %p864 = pneg %p277
        $region70: #{tpu_custom_call.1} parent=67 // pred_check_branch
          %866 = sbr.rel (%p864) target = $region72
        $region71: #{tpu_custom_call.1} parent=67 // pred_region
          %s867 = sand.u32 %s262, 1
          %s868 = scalar_lea.sflag [#allocation3], %s867
          %s869 = sand.u32 %s262, 1
          %s870 = smul.addr %s869, 16
          %s871 = scalar_lea.vmem [#allocation2], %s870
          %872 = dma.done %s868, 256
        $region72: #{tpu_custom_call.1} parent=67 // pred_fallthru
          _
      $region68: #{tpu_custom_call.1} parent=5 // pred_fallthru
        _
    $region6: #{tpu_custom_call.1} parent=1 // loop_footer
      %s23 = sadd.s32 1, %s19
    $region7: #{tpu_custom_call.1} parent=1 // loop_footer_branch
      %18 = sbr.rel target = $region3
    $region8: #{tpu_custom_call.1} parent=1 // loop_exit
      _
    %873 = vsyncpa [#allocation3], 1
    %s874 = scalar_lea.sflag [#allocation3], 1
    %875 = vsyncpa %s874, 1

</llo_original>
